<compile_context>
chip_gen: v7x
topology: tpu7x:2x2x1
jax: 0.10.0
libtpu: 0.0.40
codegen_flags: <defaults>
</compile_context>

<pallas_src>
import jax
import jax.numpy as jnp
from jax.experimental import pallas as pl
from jax.experimental.pallas import tpu as pltpu

# Widest-first lane candidates (all multiples of 128) for the 2-D slab layout.
_LANE_CANDIDATES = (32768, 16384, 8192, 4096, 2048, 1024, 512, 256, 128)

# Below this size the Pallas launch overhead dominates; just reshape.
_SMALL_INPUT_BYPASS_BYTES = 1 << 20  # 1 MiB

# Number of concurrently outstanding HBM->HBM DMAs.
_MAX_OUTSTANDING_DMAS = 4


def _pick_lane(n):
    """Widest lane (multiple of 128) dividing n, preferring >= 8 rows."""
    for cand in _LANE_CANDIDATES:
        if n % cand == 0 and n // cand >= 8:
            return cand
    for cand in _LANE_CANDIDATES:
        if n % cand == 0:
            return cand
    return None


def _row_chunks(rows, max_chunks=_MAX_OUTSTANDING_DMAS):
    """Split `rows` into <= max_chunks static chunks with 8-aligned starts."""
    if rows % 8 != 0 or rows < 16:
        return ((0, rows),)
    nch = min(max_chunks, rows // 8)
    base = (rows // nch) // 8 * 8  # >= 8 because rows >= 8 * nch
    chunks, r0 = [], 0
    for c in range(nch):
        rc = base if c < nch - 1 else rows - r0
        chunks.append((r0, rc))
        r0 += rc
    return tuple(chunks)


def _hbm_copy_2d(flat, lane):
    """Direct HBM->HBM DMA copy of a contiguous 1-D array via a (rows, lane) slab."""
    n = flat.shape[0]
    itemsize = jnp.dtype(flat.dtype).itemsize
    rows = n // lane
    slab = jnp.reshape(flat, (rows, lane))  # free: contiguous row-major view
    chunks = _row_chunks(rows)
    n_chunks = len(chunks)

    def kernel(x_hbm, o_hbm, sems):
        # Issue all chunked HBM->HBM DMAs (<= _MAX_OUTSTANDING_DMAS in flight),
        # then drain.  No VMEM staging, no vector loads/stores in the body.
        copies = []
        for idx, (r0, rc) in enumerate(chunks):  # static python ints -> views
            cp = pltpu.make_async_copy(
                x_hbm.at[r0:r0 + rc, :],
                o_hbm.at[r0:r0 + rc, :],
                sems.at[idx],
            )
            cp.start()
            copies.append(cp)
        for cp in copies:
            cp.wait()

    out = pl.pallas_call(
        kernel,
        out_shape=jax.ShapeDtypeStruct((rows, lane), flat.dtype),
        in_specs=[pl.BlockSpec(memory_space=pl.ANY)],
        out_specs=pl.BlockSpec(memory_space=pl.ANY),
        scratch_shapes=[pltpu.SemaphoreType.DMA((n_chunks,))],
        cost_estimate=pl.CostEstimate(
            flops=0, transcendentals=0, bytes_accessed=2 * n * itemsize),
    )(slab)
    return jnp.reshape(out, (n,))


def _materialize_copy(flat, min_kernel_bytes):
    """Explicit copy of a contiguous 1-D array through the Pallas DMA kernel."""
    n = flat.shape[0]
    itemsize = jnp.dtype(flat.dtype).itemsize
    if n == 0 or n * itemsize < min_kernel_bytes:
        # Small-input bypass: launch overhead would dominate.
        return flat

    lane = _pick_lane(n)
    if lane is not None:
        return _hbm_copy_2d(flat, lane)

    # Ragged total (n not a multiple of 128): copy the 128-aligned prefix
    # through the lane-dense 2-D path; stitch the <128-element tail outside.
    n_main = (n // 128) * 128
    if n_main == 0:
        return flat
    head = _hbm_copy_2d(flat[:n_main], _pick_lane(n_main))
    return jnp.concatenate([head, flat[n_main:]])


def flatten_pallas(x, full: bool = False, materialize: bool = False,
                   min_kernel_bytes: int = _SMALL_INPUT_BYPASS_BYTES):
    """Pallas equivalent of Flatten(full).forward(x) for contiguous NCHW x.

    Default (materialize=False) is the fast path: a pure metadata reshape with
    zero HBM traffic.  materialize=True inserts an explicit HBM->HBM DMA copy
    as a fusion/materialization boundary.
    """
    b = x.shape[0]
    target = (-1,) if full else (b, -1)
    if not materialize:
        return jnp.reshape(x, target)
    flat = jnp.reshape(x, (-1,))                      # free; same as torch .view()
    flat = _materialize_copy(flat, min_kernel_bytes)  # explicit DMA copy
    return jnp.reshape(flat, target)


if __name__ == "__main__":
    key = jax.random.PRNGKey(0)
    # Small NCHW input consistent with a conv-net feature map.
    x = jax.random.normal(key, (2, 4, 16, 16), dtype=jnp.float32)

    # Default fast path: pure metadata reshape (zero HBM traffic).
    y0 = jax.block_until_ready(flatten_pallas(x, full=False))
    assert y0.shape == (2, 4 * 16 * 16), y0.shape
    assert jnp.array_equal(y0, jnp.reshape(x, (2, -1)))

    # Explicit materialization: exercises the Pallas HBM->HBM DMA kernel.
    # (min_kernel_bytes=0 disables the small-input bypass so the kernel runs
    #  even at this deliberately tiny test shape.)
    y = jax.block_until_ready(
        flatten_pallas(x, full=False, materialize=True, min_kernel_bytes=0))
    assert y.shape == (2, 4 * 16 * 16), y.shape
    assert y.dtype == x.dtype
    assert jnp.array_equal(y, jnp.reshape(x, (2, -1)))

    # full=True: (B*C*H*W,)
    z = jax.block_until_ready(
        flatten_pallas(x, full=True, materialize=True, min_kernel_bytes=0))
    assert z.shape == (2 * 4 * 16 * 16,), z.shape
    assert jnp.array_equal(z, jnp.reshape(x, (-1,)))

    # Ragged total size (not a multiple of 128): 128-aligned prefix goes
    # through the kernel, the <128-element tail is stitched outside.
    x2 = jax.random.normal(jax.random.PRNGKey(0), (2, 3, 5, 7), dtype=jnp.float32)
    w = jax.block_until_ready(
        flatten_pallas(x2, full=True, materialize=True, min_kernel_bytes=0))
    assert w.shape == (2 * 3 * 5 * 7,), w.shape
    assert jnp.array_equal(w, jnp.reshape(x2, (-1,)))

    print("KERNEL_OK")
</pallas_src>

<mosaic_0001>
module attributes {stable_mosaic.version = 11 : i64} {
  func.func @kernel(%arg0: memref<8x256xf32, #tpu.memory_space<any>>, %arg1: memref<8x256xf32, #tpu.memory_space<any>>, %arg2: memref<1x!tpu.dma_semaphore, #tpu.memory_space<semaphore_mem>>) attributes {dimension_semantics = [], scalar_prefetch = 0 : i64, scratch_operands = 1 : i64, tpu.core_type = #tpu.core_type<tc>} {
    %c0_i32 = arith.constant 0 : i32
    %c0_i32_0 = arith.constant 0 : i32
    %c0_i32_1 = arith.constant 0 : i32
    %0 = tpu.memref_slice %arg0[%c0_i32_0, %c0_i32_1] : memref<8x256xf32, #tpu.memory_space<any>> -> memref<8x256xf32, #tpu.memory_space<any>>
    %c0_i32_2 = arith.constant 0 : i32
    %c0_i32_3 = arith.constant 0 : i32
    %1 = tpu.memref_slice %arg1[%c0_i32_2, %c0_i32_3] : memref<8x256xf32, #tpu.memory_space<any>> -> memref<8x256xf32, #tpu.memory_space<any>>
    %2 = tpu.memref_slice %arg2[%c0_i32] : memref<1x!tpu.dma_semaphore, #tpu.memory_space<semaphore_mem>> -> memref<1x!tpu.dma_semaphore, #tpu.memory_space<semaphore_mem>>
    %3 = tpu.memref_squeeze %2 : memref<1x!tpu.dma_semaphore, #tpu.memory_space<semaphore_mem>> -> memref<!tpu.dma_semaphore, #tpu.memory_space<semaphore_mem>>
    tpu.enqueue_dma source(%0 : memref<8x256xf32, #tpu.memory_space<any>>) target(%1 : memref<8x256xf32, #tpu.memory_space<any>>) target_semaphore(%3 : memref<!tpu.dma_semaphore, #tpu.memory_space<semaphore_mem>>)
    %c0_i32_4 = arith.constant 0 : i32
    %c0_i32_5 = arith.constant 0 : i32
    %c0_i32_6 = arith.constant 0 : i32
    %4 = tpu.memref_slice %arg0[%c0_i32_5, %c0_i32_6] : memref<8x256xf32, #tpu.memory_space<any>> -> memref<8x256xf32, #tpu.memory_space<any>>
    %c0_i32_7 = arith.constant 0 : i32
    %c0_i32_8 = arith.constant 0 : i32
    %5 = tpu.memref_slice %arg1[%c0_i32_7, %c0_i32_8] : memref<8x256xf32, #tpu.memory_space<any>> -> memref<8x256xf32, #tpu.memory_space<any>>
    %6 = tpu.memref_slice %arg2[%c0_i32_4] : memref<1x!tpu.dma_semaphore, #tpu.memory_space<semaphore_mem>> -> memref<1x!tpu.dma_semaphore, #tpu.memory_space<semaphore_mem>>
    %7 = tpu.memref_squeeze %6 : memref<1x!tpu.dma_semaphore, #tpu.memory_space<semaphore_mem>> -> memref<!tpu.dma_semaphore, #tpu.memory_space<semaphore_mem>>
    tpu.wait_dma2 semaphore(%7 : memref<!tpu.dma_semaphore, #tpu.memory_space<semaphore_mem>>) src(%4 : memref<8x256xf32, #tpu.memory_space<any>>) dst(%5 : memref<8x256xf32, #tpu.memory_space<any>>)
    return
  }
}

</mosaic_0001>

<llo_original>
// kernel: tpu_custom_call.1
$region0: #{tpu_custom_call.1}
  #allocation0 [shape = 'u32[]', space=smem, size = 0x4, offset = 0x4, fixed_abs, tag = 'smem constant byte address 0x4 - core index']
  #allocation1 [shape = 'u32[144,128]{1,0:T(1,128)}', space=vmem, size = 0x12000, scoped, tag = 'internal scratch']
  #allocation2 [shape = 's32[1]{0}', space=sflag, size = 0x4, scoped, tag = 'scratch operand']
  #allocation3 [shape = 's32[]', space=sflag, size = 0x4, offset = 0, fixed_abs, tag = 'sflag constant byte address 0x0 - dummy sync flag']
  #allocation4 [shape = 'u32[0]{0}', space=smem, size = 0, offset = 0, fixed_abs, tag = 'smem constant byte address 0x0 - null']
  %s0 = inlined_call_operand.hbm [shape: f32[8,256], index: 0, kind: input, shape index: {}]
  %s1 = inlined_call_operand.hbm [shape: f32[8,256], index: 1, kind: output, shape index: {}]
  %s2 = sld [smem:[#allocation0]]
  $region2: #{tpu_custom_call.1} parent=0
    _
  %s4 = ssub.s32 1, %s2
  %s5 = scalar_select 0, %s4, %s2
  %s7 = sshll.u32 1, 14
  %s8 = sxor.u32 4294967295, %s7
  %s11 = sshll.u32 3, 24
  %s12 = sxor.u32 4294967295, %s11
  %s13 = sand.u32 0, %s12
  %s15 = sor.u32 %s13, 0
  %18 = dma.general %s0, 256, %s1, [#allocation2], [#allocation3], [#allocation4], %s15, 0
  %s19 = smul.u32 8, 1
  %s20 = smul.u32 %s19, 2
  %s21 = sshll.u32 %s20, 4
  %22 = dma.done [#allocation2], %s21
  %23 = vsyncmov [#allocation2]
  %s24 = vpop.sfrf %23
  %p25 = scmp.eq.s32.totalorder %s24, 0
  %p26 = pneg %p25
  %28 = shalt.err (%p26)

</llo_original>
